<compile_context>
chip_gen: v7x
topology: tpu7x:2x2x1
jax: 0.10.0
libtpu: 0.0.40
codegen_flags: <defaults>
</compile_context>

<pallas_src>
import jax
import jax.numpy as jnp
from jax.experimental import pallas as pl
from jax.experimental.pallas import tpu as pltpu

_LANE = 128
_TARGET_BLOCK_BYTES = 4 << 20   # ~4 MiB per (double-buffered) block
_MIN_GRID_STEPS = 4             # >=2 for v7x's 2 TCs; 4 hides pipeline ramp
_VMEM_LIMIT_BYTES = 48 << 20    # fits v7x's 64 MiB physical, > v5e/v6e defaults
_XLA_FALLBACK_BYTES = 4 << 20   # below this, let XLA fuse the elementwise op


def _round_up(x, m):
    return (x + m - 1) // m * m


def _param_loss_kernel(po_ref, pg_ref, valid_ref, out_ref):
    # HBM-bandwidth-bound elementwise op.  Compute in the native input dtype:
    # bf16 stays packed on v6e/v7x VALUs; Mosaic inserts widening on v5e.
    diff = jnp.abs(po_ref[...] - pg_ref[...])
    v = valid_ref[...].astype(diff.dtype)       # [tb,1] broadcast or [tb,P]
    out_ref[...] = (diff * v).astype(out_ref.dtype)


def _pick_tile_b(B, P, itemsize):
    """Rows per block: ~4 MiB of lane-padded footprint, but always split the
    batch into >= _MIN_GRID_STEPS blocks when it is big enough (pipelining +
    v7x cross-TC sharding).  Sublane (8)-aligned when tiling."""
    row_bytes = _round_up(P, _LANE) * itemsize   # real VMEM footprint per row
    rows = max(1, _TARGET_BLOCK_BYTES // row_bytes)
    rows = min(rows, pl.cdiv(B, _MIN_GRID_STEPS))
    if rows >= B:
        return B                                 # tiny batch: single block
    rows = max(8, (rows // 8) * 8)               # sublane alignment
    return min(rows, B)


def param_loss(param_out, param_gt, valid, *, force_pallas=False):
    """Pallas TPU implementation of ParamLoss.forward.

    param_out, param_gt: [B, P] float
    valid:               [B, 1] or [B, P] (broadcastable, as in PyTorch)
    returns:             [B, P] same dtype as param_out
    """
    assert param_out.shape == param_gt.shape
    B, P = param_out.shape
    if valid.ndim == 1:
        valid = valid[:, None]
    V = valid.shape[1]
    assert V in (1, P), f"valid trailing dim must be 1 or {P}, got {V}"

    itemsize = jnp.dtype(param_out.dtype).itemsize

    # Small problems: let XLA fuse it — custom-call overhead + lost fusion
    # with producers/consumers dominates any Pallas benefit.
    if not force_pallas and B * P * itemsize < _XLA_FALLBACK_BYTES:
        return (jnp.abs(param_out - param_gt) * valid).astype(param_out.dtype)

    tile_b = _pick_tile_b(B, P, itemsize)
    grid = (pl.cdiv(B, tile_b),)

    return pl.pallas_call(
        _param_loss_kernel,
        out_shape=jax.ShapeDtypeStruct((B, P), param_out.dtype),
        grid=grid,
        in_specs=[
            pl.BlockSpec((tile_b, P), lambda i: (i, 0)),
            pl.BlockSpec((tile_b, P), lambda i: (i, 0)),
            pl.BlockSpec((tile_b, V), lambda i: (i, 0)),
        ],
        out_specs=pl.BlockSpec((tile_b, P), lambda i: (i, 0)),
        compiler_params=pltpu.CompilerParams(
            dimension_semantics=("parallel",),     # v7x: shard rows across 2 TCs
            vmem_limit_bytes=_VMEM_LIMIT_BYTES,    # allow the 4 MiB blocks
        ),
    )(param_out, param_gt, valid)


if __name__ == "__main__":
    key = jax.random.PRNGKey(0)
    k1, k2, k3 = jax.random.split(key, 3)

    # SMPL-style pose/shape parameter vector.
    B, P = 2, 72
    param_out = jax.random.normal(k1, (B, P), dtype=jnp.float32)
    param_gt = jax.random.normal(k2, (B, P), dtype=jnp.float32)
    valid = (jax.random.uniform(k3, (B, 1)) > 0.3).astype(jnp.float32)

    loss = param_loss(param_out, param_gt, valid, force_pallas=True)
    jax.block_until_ready(loss)
    ref = jnp.abs(param_out - param_gt) * valid
    assert loss.shape == (B, P)
    assert jnp.allclose(loss, ref, atol=1e-6), "mismatch vs reference ([B,1] valid)"

    # Full [B, P] valid mask.
    k4, k5, k6 = jax.random.split(jax.random.PRNGKey(1), 3)
    B2, P2 = 16, 72
    po2 = jax.random.normal(k4, (B2, P2), dtype=jnp.float32)
    pg2 = jax.random.normal(k5, (B2, P2), dtype=jnp.float32)
    valid2 = (jax.random.uniform(k6, (B2, P2)) > 0.5).astype(jnp.float32)
    loss2 = param_loss(po2, pg2, valid2, force_pallas=True)
    jax.block_until_ready(loss2)
    ref2 = jnp.abs(po2 - pg2) * valid2
    assert jnp.allclose(loss2, ref2, atol=1e-6), "mismatch vs reference ([B,P] valid)"

    # Multi-step grid with a partial last batch block (exercises masked stores).
    k7, k8, k9 = jax.random.split(jax.random.PRNGKey(2), 3)
    B3, P3 = 100, 72
    po3 = jax.random.normal(k7, (B3, P3), dtype=jnp.float32)
    pg3 = jax.random.normal(k8, (B3, P3), dtype=jnp.float32)
    valid3 = (jax.random.uniform(k9, (B3, 1)) > 0.3).astype(jnp.float32)
    loss3 = param_loss(po3, pg3, valid3, force_pallas=True)
    jax.block_until_ready(loss3)
    ref3 = jnp.abs(po3 - pg3) * valid3
    assert jnp.allclose(loss3, ref3, atol=1e-6), "mismatch vs reference (tiled batch)"

    print("KERNEL_OK")
</pallas_src>

<mosaic_0001>
module attributes {stable_mosaic.version = 11 : i64} {
  func.func @_param_loss_kernel(%arg0: i32, %arg1: memref<2x72xf32, #tpu.memory_space<vmem>>, %arg2: memref<2x72xf32, #tpu.memory_space<vmem>>, %arg3: memref<2x1xf32, #tpu.memory_space<vmem>>, %arg4: memref<2x72xf32, #tpu.memory_space<vmem>>) attributes {dimension_semantics = [#tpu.dimension_semantics<parallel>], iteration_bounds = array<i64: 1>, scalar_prefetch = 0 : i64, scratch_operands = 0 : i64, tpu.core_type = #tpu.core_type<tc>, window_params = [{transform_indices = @transform_0, window_bounds = array<i64: 2, 72>}, {transform_indices = @transform_1, window_bounds = array<i64: 2, 72>}, {transform_indices = @transform_2, window_bounds = array<i64: 2, 1>}, {transform_indices = @transform_3, window_bounds = array<i64: 2, 72>}]} {
    %c0 = arith.constant 0 : index
    %c0_0 = arith.constant 0 : index
    %0 = vector.load %arg1[%c0, %c0_0] : memref<2x72xf32, #tpu.memory_space<vmem>>, vector<2x72xf32>
    %c0_1 = arith.constant 0 : index
    %c0_2 = arith.constant 0 : index
    %1 = vector.load %arg2[%c0_1, %c0_2] : memref<2x72xf32, #tpu.memory_space<vmem>>, vector<2x72xf32>
    %2 = arith.subf %0, %1 : vector<2x72xf32>
    %3 = math.absf %2 : vector<2x72xf32>
    %c0_3 = arith.constant 0 : index
    %c0_4 = arith.constant 0 : index
    %4 = vector.load %arg3[%c0_3, %c0_4] : memref<2x1xf32, #tpu.memory_space<vmem>>, vector<2x1xf32>
    %5 = vector.broadcast %4 : vector<2x1xf32> to vector<2x72xf32>
    %6 = arith.mulf %3, %5 : vector<2x72xf32>
    %c0_5 = arith.constant 0 : index
    %c0_6 = arith.constant 0 : index
    %7 = vector.load %arg4[%c0_5, %c0_6] : memref<2x72xf32, #tpu.memory_space<vmem>>, vector<2x72xf32>
    tpu.vector_store %arg4[%c0_5, %c0_6], %6 {strides = array<i32>} : memref<2x72xf32, #tpu.memory_space<vmem>>, vector<2x72xf32>,
    return
  }
  func.func @transform_0(%arg0: i32) -> (i32, i32) {
    %c0_i32 = arith.constant 0 : i32
    %c0_i32_0 = arith.constant 0 : i32
    return %arg0, %c0_i32 : i32, i32
  }
  func.func @transform_1(%arg0: i32) -> (i32, i32) {
    %c0_i32 = arith.constant 0 : i32
    %c0_i32_0 = arith.constant 0 : i32
    return %arg0, %c0_i32 : i32, i32
  }
  func.func @transform_2(%arg0: i32) -> (i32, i32) {
    %c0_i32 = arith.constant 0 : i32
    %c0_i32_0 = arith.constant 0 : i32
    return %arg0, %c0_i32 : i32, i32
  }
  func.func @transform_3(%arg0: i32) -> (i32, i32) {
    %c0_i32 = arith.constant 0 : i32
    %c0_i32_0 = arith.constant 0 : i32
    return %arg0, %c0_i32 : i32, i32
  }
}

</mosaic_0001>

<llo_original>
// kernel: tpu_custom_call.1
$region0: #{tpu_custom_call.1}
  #allocation0 [shape = 'u32[]', space=smem, size = 0x4, offset = 0x4, fixed_abs, tag = 'smem constant byte address 0x4 - core index']
  #allocation1 [shape = 'u32[144,128]{1,0:T(1,128)}', space=vmem, size = 0x12000, scoped, tag = 'internal scratch']
  %s0 = inlined_call_operand.vmem [shape: f32[2,72], index: 0, kind: input, shape index: {}]
  %s1 = inlined_call_operand.vmem [shape: f32[2,72], index: 1, kind: input, shape index: {}]
  %s2 = inlined_call_operand.vmem [shape: f32[2,1], index: 2, kind: input, shape index: {}]
  %s3 = inlined_call_operand.hbm [shape: f32[2,72], index: 3, kind: output, shape index: {}]
  %s4 = sld [smem:[#allocation0]]
  $region22: #{tpu_custom_call.1} parent=0
    _
  %s6 = ssub.s32 1, %s4
  %s7 = scalar_select 0, %s6, %s4
  $region1: #{tpu_custom_call.1} parent=0
    #allocation2 [shape = 'u8[1024]{0}', space=vmem, size = 0x400, scoped, tag = 'output window, operand 0, single buffered']
    #allocation3 [shape = 's32[1]{0}', space=sflag, size = 0x4, scoped, tag = 'scoped memory for tpu_custom_call.1']
    %8 = vsyncpa [#allocation3], 0
    // Predicated region
    $region2: #{tpu_custom_call.1} parent=1 // pred_check
      _
    $region3: #{tpu_custom_call.1} parent=1 // pred_check_branch
      %10 = sbr.rel (0) target = $region5
    $region4: #{tpu_custom_call.1} parent=1 // pred_region
      _
    $region5: #{tpu_custom_call.1} parent=1 // pred_fallthru
      _
    // Predicated region
    $region6: #{tpu_custom_call.1} parent=1 // pred_check
      _
    $region7: #{tpu_custom_call.1} parent=1 // pred_check_branch
      %12 = sbr.rel (0) target = $region9
    $region8: #{tpu_custom_call.1} parent=1 // pred_region
      _
    $region9: #{tpu_custom_call.1} parent=1 // pred_fallthru
      _
    // Predicated region
    $region10: #{tpu_custom_call.1} parent=1 // pred_check
      _
    $region11: #{tpu_custom_call.1} parent=1 // pred_check_branch
      %14 = sbr.rel (0) target = $region13
    $region12: #{tpu_custom_call.1} parent=1 // pred_region
      _
    $region13: #{tpu_custom_call.1} parent=1 // pred_fallthru
      _
    %v15 = vld [vmem:[%s0] sm:$0x3]
    %v16 = vld [vmem:[%s1] sm:$0x3]
    %v17 = vsub.f32 %v15, %v16
    %v18 = vand.u32 2147483647, %v17
    %v19 = vld [vmem:[%s2] sm:$0x3]
    %21 = vset.pattern.permute.xlu0 0
    %22 = vperm.xlu0 %21, %v19
    %v23 = vpop.permute.xlu0 %22
    %v25 = vmul.f32 %v18, %v23
    %vm26 = vcmask 582656
    %27 = vst.msk [vmem:[#allocation2] sm:$0x3] %vm26, %v25
    // Predicated region
    $region14: #{tpu_custom_call.1} parent=1 // pred_check
      _
    $region15: #{tpu_custom_call.1} parent=1 // pred_check_branch
      %29 = sbr.rel (0) target = $region17
    $region16: #{tpu_custom_call.1} parent=1 // pred_region
      %s31 = ssub.s32 32, 32
      %32 = vsyncadd [#allocation3], %s31
      %s34 = sshll.u32 [#allocation2], 4
      %s35 = int_to_ptr.vmem [resolvable:$true] %s34
      %37 = dma.vmem_to_hbm [thread:$0]  %s35, 32, %s3, [#allocation3]
    $region17: #{tpu_custom_call.1} parent=1 // pred_fallthru
      _
    // Predicated region
    $region18: #{tpu_custom_call.1} parent=1 // pred_check
      _
    $region19: #{tpu_custom_call.1} parent=1 // pred_check_branch
      %39 = sbr.rel (0) target = $region21
    $region20: #{tpu_custom_call.1} parent=1 // pred_region
      %40 = dma.done [#allocation3], 32
    $region21: #{tpu_custom_call.1} parent=1 // pred_fallthru
      _
    %41 = vsyncpa [#allocation3], 1

</llo_original>
